<compile_context>
chip_gen: v5e
topology: v5e:2x2
jax: 0.10.0
libtpu: 0.0.40
codegen_flags: <defaults>
</compile_context>

<pallas_src>
import jax
import jax.numpy as jnp
from jax.experimental import pallas as pl
from jax.experimental.pallas import tpu as pltpu


_SUBLANE_PACK = 32            # row-block multiple safe for f32 (8) / bf16 (16) / fp8 (32)
_TARGET_TILE_BYTES = 4 << 20  # ~4 MiB per-step tile; in+out double-buffered -> ~16 MiB VMEM
_VMEM_LIMIT_BYTES = 32 << 20  # <= physical VMEM on v5e/v6e (128 MiB) and v7x (64 MiB)
_MIN_BYTES_FOR_GRID = 1 << 20 # above ~1 MiB force >= 4 grid steps (pipelining / megacore)


def _tcl_kernel(up_ref, x_ref, o_ref):
    # up_ref: (1,) f32 scalar in SMEM; x_ref / o_ref: (block_rows, cols) VMEM tile.
    up = up_ref[0]                               # f32 scalar, read once per step
    x = x_ref[...].astype(jnp.float32)           # in-kernel upcast: no extra HBM bytes
    # up - relu(up - relu(x)) == clamp(x, 0, up) for every real `up`; NaNs propagate.
    o_ref[...] = jnp.minimum(jnp.maximum(x, 0.0), up).astype(o_ref.dtype)


def _round_up(v, m):
    return ((v + m - 1) // m) * m


def _pick_block_rows(rows, cols, itemsize):
    """Sublane-aligned row block; guarantees >= ~4 grid steps above ~1 MiB."""
    if rows * cols * itemsize <= _MIN_BYTES_FOR_GRID:
        return rows                              # tiny input: single full-extent block
    block_rows = max(
        _SUBLANE_PACK,
        (_TARGET_TILE_BYTES // (cols * itemsize)) // _SUBLANE_PACK * _SUBLANE_PACK)
    # At least ~4 steps so double buffering + v7x megacore row split engage.
    block_rows = min(block_rows, _round_up(pl.cdiv(rows, 4), _SUBLANE_PACK))
    return max(block_rows, _SUBLANE_PACK)


def _run_clamp_kernel(x2d, up_smem):
    rows, cols = x2d.shape
    itemsize = jnp.dtype(x2d.dtype).itemsize
    block_rows = _pick_block_rows(rows, cols, itemsize)
    grid = (pl.cdiv(rows, block_rows),)          # ragged last block is clipped by Pallas
    return pl.pallas_call(
        _tcl_kernel,
        out_shape=jax.ShapeDtypeStruct((rows, cols), x2d.dtype),
        grid=grid,
        in_specs=[
            pl.BlockSpec(memory_space=pltpu.SMEM),                 # `up` scalar
            pl.BlockSpec((block_rows, cols), lambda i: (i, 0)),
        ],
        out_specs=pl.BlockSpec((block_rows, cols), lambda i: (i, 0)),
        compiler_params=pltpu.CompilerParams(
            dimension_semantics=("parallel",),
            vmem_limit_bytes=_VMEM_LIMIT_BYTES),
        cost_estimate=pl.CostEstimate(
            flops=2 * rows * cols,
            transcendentals=0,
            bytes_accessed=2 * rows * cols * itemsize),
    )(up_smem, x2d)


def tcl_old_forward(x, up):
    """Forward of TCL_OLD:  up - relu(up - relu(x))  ==  clamp(x, 0, up)."""
    # TODO(synk): integer inputs would need PyTorch integer-clamp semantics; float only here.
    orig_shape = x.shape
    total = x.size
    up_smem = jnp.asarray(up, jnp.float32).reshape(-1)[:1]   # 32-bit scalar for SMEM

    # Widest lane width (multiple of 128) that exactly divides total -> no pad, no slice.
    cols = next((c for c in (512, 256, 128) if total % c == 0), None)

    if cols is not None:
        out2d = _run_clamp_kernel(x.reshape(total // cols, cols), up_smem)
        return out2d.reshape(orig_shape)

    # Ragged total: kernel on the 512-aligned prefix, plain-jnp clamp on the <512 tail.
    flat = x.reshape(-1)
    aligned = (total // 512) * 512
    up_scalar = up_smem[0]
    tail = flat[aligned:]
    tail_out = jnp.minimum(jnp.maximum(tail.astype(jnp.float32), 0.0),
                           up_scalar).astype(flat.dtype)
    if aligned == 0:
        return tail_out.reshape(orig_shape)
    head = _run_clamp_kernel(flat[:aligned].reshape(aligned // 512, 512), up_smem)
    return jnp.concatenate([head.reshape(-1), tail_out]).reshape(orig_shape)


def _reference(x, up):
    # Exact PyTorch forward semantics: relu -> up - x -> relu -> up - x (in f32).
    xf = x.astype(jnp.float32)
    r = jnp.maximum(xf, 0.0)
    r = up - r
    r = jnp.maximum(r, 0.0)
    r = up - r
    return r.astype(x.dtype)


if __name__ == "__main__":
    key = jax.random.PRNGKey(0)
    up = jnp.array([4.0], dtype=jnp.float32)     # deterministic param, as in __init__

    # --- module-implied small shape (2048 elems -> single (4, 512) block) -----
    x = jax.random.normal(key, (2, 4, 16, 16), dtype=jnp.float32) * 3.0
    out = jax.block_until_ready(tcl_old_forward(x, up))
    assert out.shape == x.shape and out.dtype == x.dtype
    assert jnp.allclose(out, _reference(x, up[0]), atol=1e-5), "mismatch (small)"

    k1, k2, k3 = jax.random.split(key, 3)

    # --- ragged total (10395 elems): aligned prefix via kernel + jnp tail -----
    x_pad = jax.random.normal(k1, (3, 5, 33, 21), dtype=jnp.float32) * 3.0
    out_pad = jax.block_until_ready(tcl_old_forward(x_pad, up))
    assert jnp.allclose(out_pad, _reference(x_pad, up[0]), atol=1e-5), "mismatch (ragged)"

    # --- large input (1M elems): multi-step grid, megacore-parallel rows ------
    x_big = jax.random.normal(k2, (32, 8, 64, 64), dtype=jnp.float32) * 3.0
    out_big = jax.block_until_ready(tcl_old_forward(x_big, up))
    assert jnp.allclose(out_big, _reference(x_big, up[0]), atol=1e-5), "mismatch (gridded)"

    # --- bf16 activations stay bf16 in HBM; clamp compare done in f32 in-kernel
    x_bf16 = (jax.random.normal(k3, (2, 4, 16, 16), dtype=jnp.float32) * 3.0).astype(jnp.bfloat16)
    out_bf16 = jax.block_until_ready(tcl_old_forward(x_bf16, up))
    assert out_bf16.dtype == jnp.bfloat16
    assert jnp.allclose(out_bf16.astype(jnp.float32),
                        _reference(x_bf16, up[0]).astype(jnp.float32), atol=1e-2), \
        "mismatch (bf16)"

    print("KERNEL_OK")
</pallas_src>

<mosaic_0001>
module attributes {stable_mosaic.version = 11 : i64} {
  func.func @_tcl_kernel(%arg0: i32, %arg1: memref<1xf32, #tpu.memory_space<smem>>, %arg2: memref<4x512xf32, #tpu.memory_space<vmem>>, %arg3: memref<4x512xf32, #tpu.memory_space<vmem>>) attributes {dimension_semantics = [#tpu.dimension_semantics<parallel>], iteration_bounds = array<i64: 1>, scalar_prefetch = 0 : i64, scratch_operands = 0 : i64, tpu.core_type = #tpu.core_type<tc>, window_params = [{transform_indices = @transform_0, window_bounds = array<i64: 1>}, {transform_indices = @transform_1, window_bounds = array<i64: 4, 512>}, {transform_indices = @transform_2, window_bounds = array<i64: 4, 512>}]} {
    %c0 = arith.constant 0 : index
    %0 = memref.load %arg1[%c0] : memref<1xf32, #tpu.memory_space<smem>>
    %c0_0 = arith.constant 0 : index
    %c0_1 = arith.constant 0 : index
    %1 = vector.load %arg2[%c0_0, %c0_1] : memref<4x512xf32, #tpu.memory_space<vmem>>, vector<4x512xf32>
    %cst = arith.constant 0.000000e+00 : f32
    %2 = vector.broadcast %cst : f32 to vector<4x512xf32>
    %3 = arith.maximumf %1, %2 : vector<4x512xf32>
    %4 = vector.broadcast %0 : f32 to vector<4x512xf32>
    %5 = arith.minimumf %3, %4 : vector<4x512xf32>
    %c0_2 = arith.constant 0 : index
    %c0_3 = arith.constant 0 : index
    %6 = vector.load %arg3[%c0_2, %c0_3] : memref<4x512xf32, #tpu.memory_space<vmem>>, vector<4x512xf32>
    tpu.vector_store %arg3[%c0_2, %c0_3], %5 {strides = array<i32>} : memref<4x512xf32, #tpu.memory_space<vmem>>, vector<4x512xf32>,
    return
  }
  func.func @transform_0(%arg0: i32) -> i32 {
    %c0_i32 = arith.constant 0 : i32
    %c0_i32_0 = arith.constant 0 : i32
    return %c0_i32 : i32
  }
  func.func @transform_1(%arg0: i32) -> (i32, i32) {
    %c0_i32 = arith.constant 0 : i32
    %c0_i32_0 = arith.constant 0 : i32
    return %arg0, %c0_i32 : i32, i32
  }
  func.func @transform_2(%arg0: i32) -> (i32, i32) {
    %c0_i32 = arith.constant 0 : i32
    %c0_i32_0 = arith.constant 0 : i32
    return %arg0, %c0_i32 : i32, i32
  }
}

</mosaic_0001>

<llo_original>
// kernel: tpu_custom_call.1
$region0: #{tpu_custom_call.1}
  #allocation0 [shape = 'u32[]', space=smem, size = 0x4, offset = 0x4, fixed_abs, tag = 'smem constant byte address 0x4 - core index']
  #allocation1 [shape = 'u32[72,128]{1,0:T(1,128)}', space=vmem, size = 0x9000, scoped, tag = 'internal scratch']
  #allocation2 [shape = 'f32[1]{0:T(128)S(6)}', space=smem, size = 0x200, scoped, tag = 'scoped memory for tpu_custom_call.1']
  %s0 = inlined_call_operand.<no memory space> [shape: f32[1], index: 0, kind: input, shape index: {}]
  %s1 = inlined_call_operand.hbm [shape: f32[4,512], index: 1, kind: input, shape index: {}]
  %s2 = inlined_call_operand.hbm [shape: f32[4,512], index: 2, kind: output, shape index: {}]
  %s3 = sld [smem:[#allocation0]]
  $region22: #{tpu_custom_call.1} parent=0
    _
  %s5 = ssub.s32 1, %s3
  %s6 = scalar_select 0, %s5, %s3
  %7 = sst [smem:[#allocation2]] %s0
  $region1: #{tpu_custom_call.1} parent=0
    #allocation3 [shape = 'u8[8192]{0}', space=vmem, size = 0x2000, scoped, tag = 'input window, operand 1, single buffered']
    #allocation4 [shape = 's32[1]{0}', space=sflag, size = 0x4, scoped, tag = 'scoped memory for tpu_custom_call.1']
    #allocation5 [shape = 's32[1]{0}', space=sflag, size = 0x4, scoped, tag = 'scoped memory for tpu_custom_call.1']
    #allocation6 [shape = 'u8[8192]{0}', space=vmem, size = 0x2000, scoped, tag = 'output window, operand 0, single buffered']
    %8 = vsyncpa [#allocation4], 0
    %9 = vsyncpa [#allocation5], 0
    // Predicated region
    $region2: #{tpu_custom_call.1} parent=1 // pred_check
      _
    $region3: #{tpu_custom_call.1} parent=1 // pred_check_branch
      %11 = sbr.rel (0) target = $region5
    $region4: #{tpu_custom_call.1} parent=1 // pred_region
      _
    $region5: #{tpu_custom_call.1} parent=1 // pred_fallthru
      _
    // Predicated region
    $region6: #{tpu_custom_call.1} parent=1 // pred_check
      _
    $region7: #{tpu_custom_call.1} parent=1 // pred_check_branch
      %13 = sbr.rel (0) target = $region9
    $region8: #{tpu_custom_call.1} parent=1 // pred_region
      %15 = vsyncadd [#allocation4], 0
      %s17 = sshll.u32 %s1, 4
      %s18 = int_to_ptr.hbm [resolvable:$true] %s17
      %s19 = sshll.u32 [#allocation3], 4
      %s20 = int_to_ptr.vmem [resolvable:$true] %s19
      %22 = dma.hbm_to_vmem [thread:$0]  %s18, 256, %s20, [#allocation4]
    $region9: #{tpu_custom_call.1} parent=1 // pred_fallthru
      _
    // Predicated region
    $region10: #{tpu_custom_call.1} parent=1 // pred_check
      _
    $region11: #{tpu_custom_call.1} parent=1 // pred_check_branch
      %24 = sbr.rel (0) target = $region13
    $region12: #{tpu_custom_call.1} parent=1 // pred_region
      %26 = dma.done [#allocation4], 256
    $region13: #{tpu_custom_call.1} parent=1 // pred_fallthru
      _
    %s27 = sld [smem:[#allocation2]]
    %v28 = vld [vmem:[#allocation3] sm:$0xff]
    %v29 = vld [vmem:[#allocation3 + $0x8] sm:$0xff]
    %v30 = vmax.f32 %v28, 0.0
    %v31 = vmax.f32 %v29, 0.0
    %v32 = vstv %s27
    %v33 = vmin.f32 %v30, %v32
    %v34 = vmin.f32 %v31, %v32
    %35 = vst [vmem:[#allocation6] sm:$0xff] %v33
    %36 = vst [vmem:[#allocation6 + $0x8] sm:$0xff] %v34
    // Predicated region
    $region14: #{tpu_custom_call.1} parent=1 // pred_check
      _
    $region15: #{tpu_custom_call.1} parent=1 // pred_check_branch
      %38 = sbr.rel (0) target = $region17
    $region16: #{tpu_custom_call.1} parent=1 // pred_region
      %40 = vsyncadd [#allocation5], 0
      %s42 = sshll.u32 [#allocation6], 4
      %s43 = int_to_ptr.vmem [resolvable:$true] %s42
      %s44 = sshll.u32 %s2, 4
      %s45 = int_to_ptr.hbm [resolvable:$true] %s44
      %47 = dma.vmem_to_hbm [thread:$0]  %s43, 256, %s45, [#allocation5]
    $region17: #{tpu_custom_call.1} parent=1 // pred_fallthru
      _
    // Predicated region
    $region18: #{tpu_custom_call.1} parent=1 // pred_check
      _
    $region19: #{tpu_custom_call.1} parent=1 // pred_check_branch
      %49 = sbr.rel (0) target = $region21
    $region20: #{tpu_custom_call.1} parent=1 // pred_region
      %51 = dma.done [#allocation5], 256
    $region21: #{tpu_custom_call.1} parent=1 // pred_fallthru
      _
    %52 = vsyncpa [#allocation4], 1
    %53 = vsyncpa [#allocation5], 1

</llo_original>
